<compile_context>
chip_gen: v7x
topology: tpu7x:2x2x1
jax: 0.10.0
libtpu: 0.0.40
codegen_flags: <defaults>
</compile_context>

<pallas_src>
import functools

import jax
import jax.numpy as jnp
from jax.experimental import pallas as pl
from jax.experimental.pallas import tpu as pltpu

MASK_VALUE = -9999999.0      # exact constant used by the PyTorch module
CROSS_MASK = -1.0e30         # additive bias for cross-graph (packed) entries


# ---------------------------------------------------------------------------
# Kernel
# ---------------------------------------------------------------------------
def _attention_agg_kernel(x_ref, adj_ref, sel_ref, bias_ref, o_ref, *,
                          use_bf16_matmul):
    # x_ref:    (G, R, D)  f32   packed node features, R = graphs_per_group * N
    # adj_ref:  (G, R, N)  int8  0/1 keep-mask (add_self already folded in)
    # sel_ref:  (N, R)     f32   selection matrix: sel[m, j] = (j % N == m)
    # bias_ref: (R, R)     f32   0 within a graph block, CROSS_MASK across graphs
    # o_ref:    (G, R, D)  f32
    cdt = jnp.bfloat16 if use_bf16_matmul else jnp.float32
    G, R, _ = x_ref.shape
    N = adj_ref.shape[-1]

    x = x_ref[...]
    xm = x.astype(cdt)

    # scores[g, i, j] = <x_i, x_j>: one lane-dense (R, R) MXU matmul per group,
    # contracting on D for both operands (no materialized transpose).
    scores = jax.lax.dot_general(
        xm, xm,
        dimension_numbers=(((2,), (2,)), ((0,), (0,))),
        preferred_element_type=jnp.float32)                      # (G, R, R)

    # Expand the per-graph (R, N) adjacency to (R, R) block layout on the MXU:
    # adj_rep[g, i, j] == adj[g, i, j % N]  (exact 0/1 values).
    adjm = adj_ref[...].astype(jnp.float32).astype(cdt)          # (G, R, N)
    selb = jnp.broadcast_to(sel_ref[...].astype(cdt)[None], (G, N, R))
    adj_rep = jax.lax.dot_general(
        adjm, selb,
        dimension_numbers=(((2,), (1,)), ((0,), (0,))),
        preferred_element_type=jnp.float32)                      # (G, R, R)

    # attention[adj == 0] = -9999999 (PyTorch semantics; keeps fully-masked
    # rows uniform over their own graph); cross-graph entries get CROSS_MASK
    # added so they contribute exactly 0 after exp.
    scores = jnp.where(adj_rep != 0.0, scores, jnp.float32(MASK_VALUE))
    scores = scores + bias_ref[...]                              # bcast over G

    # Numerically-stable softmax with normalization deferred past the second
    # matmul (row-scale the (R, D) output, not the (R, R) probabilities).
    m = jnp.max(scores, axis=-1, keepdims=True)                  # (G, R, 1)
    e = jnp.exp(scores - m)                                      # (G, R, R)
    denom = jnp.sum(e, axis=-1, keepdims=True)                   # (G, R, 1)

    out_un = jax.lax.dot_general(
        e.astype(cdt), xm,
        dimension_numbers=(((2,), (1,)), ((0,), (0,))),
        preferred_element_type=jnp.float32)                      # (G, R, D)

    # Exact reciprocal in the f32 path; approx (EUP slot) in the bf16 path.
    inv = pl.reciprocal(denom, approx=use_bf16_matmul)
    o_ref[...] = (out_un * inv).astype(o_ref.dtype)


# ---------------------------------------------------------------------------
# Geometry / VMEM heuristics
# ---------------------------------------------------------------------------
def _round_up(v, m):
    return ((v + m - 1) // m) * m


def _padded_tile_bytes(rows, cols, itemsize):
    """VMEM footprint of a (rows, cols) tile including (sublane, lane) padding."""
    sublane = {4: 8, 2: 16, 1: 32}.get(itemsize, 8)
    return _round_up(max(rows, 1), sublane) * _round_up(max(cols, 1), 128) * itemsize


def _pick_group_rows(n_nodes, n_graphs):
    """Rows per packed score block: whole graphs, ~128 rows, 32-row aligned."""
    gpg = max(1, -(-128 // n_nodes))              # ceil(128 / N)
    while (gpg * n_nodes) % 32 != 0:
        gpg += 1
    # Don't pack (and pad to) more graphs than the batch has, if alignment holds.
    if n_graphs < gpg and (n_graphs * n_nodes) % 32 == 0:
        gpg = n_graphs
    return gpg, gpg * n_nodes


def _tpu_generation():
    try:
        kind = jax.devices()[0].device_kind.lower()
    except Exception:
        return 0
    for gen in (7, 6, 5):
        if "v%d" % gen in kind:
            return gen
    return 0


def _vmem_plan():
    """(tile-selection budget, compiler vmem limit, multi-TensorCore) per chip."""
    gen = _tpu_generation()
    if gen >= 7:                       # 64 MiB VMEM per TC, 2 TCs/chip
        return 30 << 20, 40 << 20, True
    if gen in (5, 6):                  # 128 MiB VMEM, single TC
        return 52 << 20, 64 << 20, False
    return 24 << 20, 32 << 20, False   # unknown: stay conservative


def _vmem_per_step(G, R, D, N, adj_itemsize):
    """Padded-tile VMEM model for one grid step (double-buffered blocks + temps)."""
    xo = _padded_tile_bytes(R, D, 4)                    # x / out block per group
    ad = _padded_tile_bytes(R, N, adj_itemsize)         # adjacency block per group
    rr = _padded_tile_bytes(R, R, 4)                    # (R, R) f32 temporaries
    per_group = 2 * (2 * xo + ad)                       # pipelined, 2 buffers each
    per_group += 4 * rr + 3 * xo                        # scores/e/adj_rep + misc
    resident = 2 * (rr + _padded_tile_bytes(N, R, 4))   # cross-bias + selection
    return G * per_group + resident


def _pick_groups_per_step(num_groups, R, D, N, adj_itemsize, budget, multi_tc,
                          max_rows_per_step=8192):
    G = 1
    while True:
        nxt = G + 1
        if nxt > num_groups:
            break
        if nxt * R > max_rows_per_step:
            break
        if _vmem_per_step(nxt, R, D, N, adj_itemsize) > budget:
            break
        G = nxt
    if multi_tc and num_groups >= 2:
        # v7x: keep >= 2 grid steps so both TensorCores get work.
        G = min(G, max(1, num_groups // 2))
    return G


# ---------------------------------------------------------------------------
# Wrapper
# ---------------------------------------------------------------------------
def attention_aggregator(node_features, nodes, adj_list, *, add_self,
                         sample_num=None, use_bf16_matmul=None):
    """JAX/Pallas equivalent of Attention_aggregator.forward.

    node_features: (B, N, D); nodes unused (signature parity); adj_list (B, N, N).
    """
    del nodes, sample_num
    B, N, D = node_features.shape
    assert adj_list.shape == (B, N, N)

    if use_bf16_matmul is None:
        # bf16 matmuls (~3x MXU throughput) by default on v6e/v7x, f32 elsewhere.
        use_bf16_matmul = _tpu_generation() >= 6

    x2 = node_features.reshape(B * N, D).astype(jnp.float32)

    # Exact PyTorch semantics: mask where (adj + eye) == 0 when add_self.
    adj_f = adj_list.astype(jnp.float32)
    if add_self:
        adj_f = adj_f + jnp.eye(N, dtype=jnp.float32)[None]
    # int8 0/1 keep-mask: 4x less adjacency HBM traffic than streaming f32.
    adjk = (adj_f != 0.0).astype(jnp.int8).reshape(B * N, N)

    # --- packing geometry ---------------------------------------------------
    gpg, R = _pick_group_rows(N, B)                    # graphs/group, rows/group
    budget, vmem_limit, multi_tc = _vmem_plan()
    num_groups_min = -(-B // gpg)
    G = _pick_groups_per_step(num_groups_min, R, D, N, adjk.dtype.itemsize,
                              budget, multi_tc)
    steps = -(-num_groups_min // G)
    num_groups = steps * G
    rows_pad = num_groups * R

    pad_rows = rows_pad - B * N
    if pad_rows:
        # Padded graphs: zero features + zero adjacency -> fully masked rows ->
        # uniform softmax over zero features -> zero output (sliced off below).
        x2 = jnp.pad(x2, ((0, pad_rows), (0, 0)))
        adjk = jnp.pad(adjk, ((0, pad_rows), (0, 0)))
    x3 = x2.reshape(num_groups, R, D)
    adj3 = adjk.reshape(num_groups, R, N)

    # Resident structural constants (constant index_map -> fetched once).
    gid = jnp.arange(R, dtype=jnp.int32) // N
    cross_bias = jnp.where(gid[:, None] == gid[None, :],
                           jnp.float32(0.0), jnp.float32(CROSS_MASK))
    col_node = jnp.arange(R, dtype=jnp.int32) % N
    sel = (jnp.arange(N, dtype=jnp.int32)[:, None] == col_node[None, :]
           ).astype(jnp.float32)                                      # (N, R)

    kernel = functools.partial(_attention_agg_kernel,
                               use_bf16_matmul=bool(use_bf16_matmul))

    out3 = pl.pallas_call(
        kernel,
        out_shape=jax.ShapeDtypeStruct((num_groups, R, D), jnp.float32),
        grid=(steps,),
        in_specs=[
            pl.BlockSpec((G, R, D), lambda s: (s, 0, 0)),
            pl.BlockSpec((G, R, N), lambda s: (s, 0, 0)),
            pl.BlockSpec((N, R), lambda s: (0, 0)),
            pl.BlockSpec((R, R), lambda s: (0, 0)),
        ],
        out_specs=pl.BlockSpec((G, R, D), lambda s: (s, 0, 0)),
        compiler_params=pltpu.CompilerParams(
            dimension_semantics=("parallel",),
            vmem_limit_bytes=int(vmem_limit),
        ),
    )(x3, adj3, sel, cross_bias)

    out = out3.reshape(rows_pad, D)[:B * N].reshape(B, N, D)
    return out.astype(node_features.dtype)


# ---------------------------------------------------------------------------
# Reference + self-test
# ---------------------------------------------------------------------------
def _reference(node_features, adj_list, add_self):
    B, N, D = node_features.shape
    adj = adj_list.astype(jnp.float32)
    if add_self:
        adj = adj + jnp.eye(N, dtype=jnp.float32)[None]
    att = jnp.einsum("bnd,bmd->bnm", node_features, node_features)
    att = jnp.where(adj == 0.0, MASK_VALUE, att)
    p = jax.nn.softmax(att, axis=-1)
    return jnp.einsum("bnm,bmd->bnd", p, node_features)


if __name__ == "__main__":
    key = jax.random.PRNGKey(0)
    N, D = 8, 32                       # n_agents, per-agent observation dim
    nodes = jnp.arange(N)              # unused placeholder (signature parity)

    def make_inputs(B):
        xk, ak = jax.random.split(jax.random.fold_in(key, B))
        x = jax.random.normal(xk, (B, N, D), dtype=jnp.float32)
        adj = (jax.random.uniform(ak, (B, N, N)) > 0.5).astype(jnp.float32)
        adj = adj.at[0, 3, :].set(0.0)     # fully-disconnected-row corner case
        return x, adj

    ok = True
    # Exact f32 path (B=5 exercises padding up to a whole packed group).
    for B in (8, 5):
        x, adj = make_inputs(B)
        for add_self in (True, False):
            out = attention_aggregator(x, nodes, adj, add_self=add_self,
                                       sample_num=5, use_bf16_matmul=False)
            out = jax.block_until_ready(out)
            ref = _reference(x, adj, add_self)
            ok &= out.shape == (B, N, D)
            ok &= bool(jnp.allclose(out, ref, atol=1e-4, rtol=1e-4))

    # bf16-matmul path (recommended default on v6e/v7x) with a looser tolerance.
    x, adj = make_inputs(8)
    out = attention_aggregator(x, nodes, adj, add_self=True, sample_num=5,
                               use_bf16_matmul=True)
    out = jax.block_until_ready(out)
    ref = _reference(x, adj, True)
    ok &= bool(jnp.allclose(out, ref, atol=0.1, rtol=0.1))

    assert ok, "mismatch vs reference"
    print("KERNEL_OK")
</pallas_src>

<mosaic_0001>
module attributes {stable_mosaic.version = 11 : i64} {
  func.func @_attention_agg_kernel(%arg0: i32, %arg1: memref<1x64x32xf32, #tpu.memory_space<vmem>>, %arg2: memref<1x64x8xi8, #tpu.memory_space<vmem>>, %arg3: memref<8x64xf32, #tpu.memory_space<vmem>>, %arg4: memref<64x64xf32, #tpu.memory_space<vmem>>, %arg5: memref<1x64x32xf32, #tpu.memory_space<vmem>>) attributes {dimension_semantics = [#tpu.dimension_semantics<parallel>], iteration_bounds = array<i64: 1>, scalar_prefetch = 0 : i64, scratch_operands = 0 : i64, tpu.core_type = #tpu.core_type<tc>, window_params = [{transform_indices = @transform_0, window_bounds = array<i64: 1, 64, 32>}, {transform_indices = @transform_1, window_bounds = array<i64: 1, 64, 8>}, {pipeline_mode = #tpu.pipeline_mode<synchronous>, transform_indices = @transform_2, window_bounds = array<i64: 8, 64>}, {pipeline_mode = #tpu.pipeline_mode<synchronous>, transform_indices = @transform_3, window_bounds = array<i64: 64, 64>}, {transform_indices = @transform_4, window_bounds = array<i64: 1, 64, 32>}]} {
    %c0 = arith.constant 0 : index
    %c0_0 = arith.constant 0 : index
    %c0_1 = arith.constant 0 : index
    %0 = vector.load %arg1[%c0, %c0_0, %c0_1] : memref<1x64x32xf32, #tpu.memory_space<vmem>>, vector<1x64x32xf32>
    %cst = arith.constant dense<0.000000e+00> : vector<1x64x64xf32>
    %1 = tpu.matmul %0, %0, %cst {dimension_numbers = #tpu.dot_dimension_numbers<[2], [2], [1], [1], [0, 0, 0, 1, 1, 1], [0], [0]>} : vector<1x64x32xf32>, vector<1x64x32xf32>, vector<1x64x64xf32> -> vector<1x64x64xf32>
    %c0_2 = arith.constant 0 : index
    %c0_3 = arith.constant 0 : index
    %c0_4 = arith.constant 0 : index
    %2 = vector.load %arg2[%c0_2, %c0_3, %c0_4] : memref<1x64x8xi8, #tpu.memory_space<vmem>>, vector<1x64x8xi8>
    %3 = arith.sitofp %2 : vector<1x64x8xi8> to vector<1x64x8xf32>
    %c0_5 = arith.constant 0 : index
    %c0_6 = arith.constant 0 : index
    %4 = vector.load %arg3[%c0_5, %c0_6] : memref<8x64xf32, #tpu.memory_space<vmem>>, vector<8x64xf32>
    %5 = vector.shape_cast %4 : vector<8x64xf32> to vector<1x8x64xf32>
    %cst_7 = arith.constant dense<0.000000e+00> : vector<1x64x64xf32>
    %6 = tpu.matmul %3, %5, %cst_7 {dimension_numbers = #tpu.dot_dimension_numbers<[2], [1], [1], [2], [0, 0, 0, 1, 1, 2], [0], [0]>} : vector<1x64x8xf32>, vector<1x8x64xf32>, vector<1x64x64xf32> -> vector<1x64x64xf32>
    %cst_8 = arith.constant 0.000000e+00 : f32
    %7 = vector.broadcast %cst_8 : f32 to vector<1x64x64xf32>
    %8 = arith.cmpf one, %6, %7 : vector<1x64x64xf32>
    %cst_9 = arith.constant 0xCB18967F : f32
    %9 = vector.broadcast %cst_9 : f32 to vector<1x64x64xf32>
    %10 = arith.select %8, %1, %9 : vector<1x64x64xi1>, vector<1x64x64xf32>
    %c0_10 = arith.constant 0 : index
    %c0_11 = arith.constant 0 : index
    %11 = vector.load %arg4[%c0_10, %c0_11] : memref<64x64xf32, #tpu.memory_space<vmem>>, vector<64x64xf32>
    %12 = vector.shape_cast %11 : vector<64x64xf32> to vector<1x64x64xf32>
    %13 = arith.addf %10, %12 : vector<1x64x64xf32>
    %cst_12 = arith.constant dense<0xFF800000> : vector<1x64xf32>
    %14 = vector.multi_reduction <maximumf>, %13, %cst_12 [2] : vector<1x64x64xf32> to vector<1x64xf32>
    %15 = vector.shape_cast %14 : vector<1x64xf32> to vector<1x64x1xf32>
    %16 = vector.broadcast %15 : vector<1x64x1xf32> to vector<1x64x64xf32>
    %17 = arith.subf %13, %16 : vector<1x64x64xf32>
    %18 = math.exp %17 : vector<1x64x64xf32>
    %cst_13 = arith.constant dense<0.000000e+00> : vector<1x64xf32>
    %19 = vector.multi_reduction <add>, %18, %cst_13 [2] : vector<1x64x64xf32> to vector<1x64xf32>
    %20 = vector.shape_cast %19 : vector<1x64xf32> to vector<1x64x1xf32>
    %cst_14 = arith.constant dense<0.000000e+00> : vector<1x64x32xf32>
    %21 = tpu.matmul %18, %0, %cst_14 {dimension_numbers = #tpu.dot_dimension_numbers<[2], [1], [1], [2], [0, 0, 0, 1, 1, 2], [0], [0]>} : vector<1x64x64xf32>, vector<1x64x32xf32>, vector<1x64x32xf32> -> vector<1x64x32xf32>
    %22 = tpu.reciprocal %20 : vector<1x64x1xf32> -> vector<1x64x1xf32>
    %23 = vector.broadcast %22 : vector<1x64x1xf32> to vector<1x64x32xf32>
    %24 = arith.mulf %21, %23 : vector<1x64x32xf32>
    %c0_15 = arith.constant 0 : index
    %c0_16 = arith.constant 0 : index
    %c0_17 = arith.constant 0 : index
    %25 = vector.load %arg5[%c0_15, %c0_16, %c0_17] : memref<1x64x32xf32, #tpu.memory_space<vmem>>, vector<1x64x32xf32>
    tpu.vector_store %arg5[%c0_15, %c0_16, %c0_17], %24 {strides = array<i32>} : memref<1x64x32xf32, #tpu.memory_space<vmem>>, vector<1x64x32xf32>,
    return
  }
  func.func @transform_0(%arg0: i32) -> (i32, i32, i32) {
    %c0_i32 = arith.constant 0 : i32
    %c0_i32_0 = arith.constant 0 : i32
    %c0_i32_1 = arith.constant 0 : i32
    return %arg0, %c0_i32, %c0_i32_0 : i32, i32, i32
  }
  func.func @transform_1(%arg0: i32) -> (i32, i32, i32) {
    %c0_i32 = arith.constant 0 : i32
    %c0_i32_0 = arith.constant 0 : i32
    %c0_i32_1 = arith.constant 0 : i32
    return %arg0, %c0_i32, %c0_i32_0 : i32, i32, i32
  }
  func.func @transform_2(%arg0: i32) -> (i32, i32) {
    %c0_i32 = arith.constant 0 : i32
    %c0_i32_0 = arith.constant 0 : i32
    %c0_i32_1 = arith.constant 0 : i32
    return %c0_i32, %c0_i32_0 : i32, i32
  }
  func.func @transform_3(%arg0: i32) -> (i32, i32) {
    %c0_i32 = arith.constant 0 : i32
    %c0_i32_0 = arith.constant 0 : i32
    %c0_i32_1 = arith.constant 0 : i32
    return %c0_i32, %c0_i32_0 : i32, i32
  }
  func.func @transform_4(%arg0: i32) -> (i32, i32, i32) {
    %c0_i32 = arith.constant 0 : i32
    %c0_i32_0 = arith.constant 0 : i32
    %c0_i32_1 = arith.constant 0 : i32
    return %arg0, %c0_i32, %c0_i32_0 : i32, i32, i32
  }
}

</mosaic_0001>

<llo_original>
// kernel: tpu_custom_call.1
$region0: #{tpu_custom_call.1}
  #allocation0 [shape = 'u32[]', space=smem, size = 0x4, offset = 0x4, fixed_abs, tag = 'smem constant byte address 0x4 - core index']
  #allocation1 [shape = 'u32[144,128]{1,0:T(1,128)}', space=vmem, size = 0x12000, scoped, tag = 'internal scratch']
  %s0 = inlined_call_operand.vmem [shape: f32[1,64,32], index: 0, kind: input, shape index: {}]
  %s1 = inlined_call_operand.vmem [shape: s8[1,64,8], index: 1, kind: input, shape index: {}]
  %s2 = inlined_call_operand.vmem [shape: f32[8,64], index: 2, kind: input, shape index: {}]
  %s3 = inlined_call_operand.vmem [shape: f32[64,64], index: 3, kind: input, shape index: {}]
  %s4 = inlined_call_operand.vmem [shape: f32[1,64,32], index: 4, kind: output, shape index: {}]
  %s5 = sld [smem:[#allocation0]]
  $region26: #{tpu_custom_call.1} parent=0
    _
  %s7 = ssub.s32 1, %s5
  %s8 = scalar_select 0, %s7, %s5
  // Predicated region
  $region2: #{tpu_custom_call.1} parent=0 // pred_check
    _
  $region3: #{tpu_custom_call.1} parent=0 // pred_check_branch
    %10 = sbr.rel (0) target = $region5
  $region4: #{tpu_custom_call.1} parent=0 // pred_region
    _
  $region5: #{tpu_custom_call.1} parent=0 // pred_fallthru
    _
  // Predicated region
  $region6: #{tpu_custom_call.1} parent=0 // pred_check
    _
  $region7: #{tpu_custom_call.1} parent=0 // pred_check_branch
    %12 = sbr.rel (0) target = $region9
  $region8: #{tpu_custom_call.1} parent=0 // pred_region
    _
  $region9: #{tpu_custom_call.1} parent=0 // pred_fallthru
    _
  // Predicated region
  $region10: #{tpu_custom_call.1} parent=0 // pred_check
    _
  $region11: #{tpu_custom_call.1} parent=0 // pred_check_branch
    %14 = sbr.rel (0) target = $region13
  $region12: #{tpu_custom_call.1} parent=0 // pred_region
    _
  $region13: #{tpu_custom_call.1} parent=0 // pred_fallthru
    _
  // Predicated region
  $region14: #{tpu_custom_call.1} parent=0 // pred_check
    _
  $region15: #{tpu_custom_call.1} parent=0 // pred_check_branch
    %16 = sbr.rel (0) target = $region17
  $region16: #{tpu_custom_call.1} parent=0 // pred_region
    _
  $region17: #{tpu_custom_call.1} parent=0 // pred_fallthru
    _
  %v17 = vld [vmem:[%s0] sm:$0xff]
  %v18 = vld [vmem:[%s0 + $0x8] sm:$0xff]
  %v19 = vld [vmem:[%s0 + $0x10] sm:$0xff]
  %v20 = vld [vmem:[%s0 + $0x18] sm:$0xff]
  %v21 = vld [vmem:[%s0 + $0x20] sm:$0xff]
  %v22 = vld [vmem:[%s0 + $0x28] sm:$0xff]
  %v23 = vld [vmem:[%s0 + $0x30] sm:$0xff]
  %v24 = vld [vmem:[%s0 + $0x38] sm:$0xff]
  %vm25 = vcmask 261120
  %v27 = vsel %vm25, %v17, 0
  %v30 = vsel %vm25, %v18, 0
  %v33 = vsel %vm25, %v19, 0
  %v36 = vsel %vm25, %v20, 0
  %v39 = vsel %vm25, %v21, 0
  %v42 = vsel %vm25, %v22, 0
  %v45 = vsel %vm25, %v23, 0
  %v48 = vsel %vm25, %v24, 0
  %50 = vmatprep.subr.mxu0 0.0
  %51 = vmatpush1.xpose.msra.mxu0 %v27
  %52 = vmatprep.subr.mxu0 0.0
  %53 = vmatpush1.xpose.msra.mxu0 %v30
  %54 = vmatprep.subr.mxu0 0.0
  %55 = vmatpush1.xpose.msra.mxu0 %v33
  %56 = vmatprep.subr.mxu0 0.0
  %57 = vmatpush1.xpose.msra.mxu0 %v36
  %58 = vmatprep.subr.mxu0 0.0
  %59 = vmatpush1.xpose.msra.mxu0 %v39
  %60 = vmatprep.subr.mxu0 0.0
  %61 = vmatpush1.xpose.msra.mxu0 %v42
  %62 = vmatprep.subr.mxu0 0.0
  %63 = vmatpush1.xpose.msra.mxu0 %v45
  %64 = vmatprep.subr.mxu0 0.0
  %65 = vmatpush1.xpose.msra.mxu0 %v48
  %66 = vmatprep.subr.mxu0 0.0
  %67 = vmatpush1.xpose.msra.mxu0 0.0
  %68 = vmatprep.subr.mxu0 0.0
  %69 = vmatpush1.xpose.msra.mxu0 0.0
  %70 = vmatprep.subr.mxu0 0.0
  %71 = vmatpush1.xpose.msra.mxu0 0.0
  %72 = vmatprep.subr.mxu0 0.0
  %73 = vmatpush1.xpose.msra.mxu0 0.0
  %74 = vmatprep.subr.mxu0 0.0
  %75 = vmatpush1.xpose.msra.mxu0 0.0
  %76 = vmatprep.subr.mxu0 0.0
  %77 = vmatpush1.xpose.msra.mxu0 0.0
  %78 = vmatprep.subr.mxu0 0.0
  %79 = vmatpush1.xpose.msra.mxu0 0.0
  %80 = vmatprep.subr.mxu0 0.0
  %81 = vmatpush1.xpose.msra.mxu0 0.0
  %82 = vmatprep.subr.mxu0 0.0
  %83 = vmatpush1.xpose.msra.mxu0 0.0
  %84 = vmatprep.subr.mxu0 0.0
  %85 = vmatpush1.xpose.msra.mxu0 0.0
  %86 = vmatprep.subr.mxu0 0.0
  %87 = vmatpush1.xpose.msra.mxu0 0.0
  %88 = vmatprep.subr.mxu0 0.0
  %89 = vmatpush1.xpose.msra.mxu0 0.0
  %90 = vmatprep.subr.mxu0 0.0
  %91 = vmatpush1.xpose.msra.mxu0 0.0
  %92 = vmatprep.subr.mxu0 0.0
  %93 = vmatpush1.xpose.msra.mxu0 0.0
  %94 = vmatprep.subr.mxu0 0.0
  %95 = vmatpush1.xpose.msra.mxu0 0.0
  %96 = vmatprep.subr.mxu0 0.0
  %97 = vmatpush1.xpose.msra.mxu0 0.0
  %98 = vmatprep.subr.mxu0 0.0
  %99 = vmatpush1.xpose.msra.mxu0 0.0
  %100 = vmatprep.subr.mxu0 0.0
  %101 = vmatpush1.xpose.msra.mxu0 0.0
  %102 = vmatprep.subr.mxu0 0.0
  %103 = vmatpush1.xpose.msra.mxu0 0.0
  %104 = vmatprep.subr.mxu0 0.0
  %105 = vmatpush1.xpose.msra.mxu0 0.0
  %106 = vmatprep.subr.mxu0 0.0
  %107 = vmatpush1.xpose.msra.mxu0 0.0
  %108 = vmatprep.subr.mxu0 0.0
  %109 = vmatpush1.xpose.msra.mxu0 0.0
  %110 = vmatprep.subr.mxu0 0.0
  %111 = vmatpush1.xpose.msra.mxu0 0.0
  %112 = vmatprep.subr.mxu0 0.0
  %113 = vmatpush1.xpose.msra.mxu0 0.0
  %114 = vmatprep.mubr.f32.mxu0 0.0
  %115 = vmatmul.mubr.f32.gmra.mrb[0].mxu0 %v27
  %v116 = vpop.f32.mrb[0].mxu0
  %v117 = vadd.f32 0.0, %v116
  %v118 = vpop.f32.mrb[0].mxu0
  %119 = vmatprep.mubr.f32.mxu0 0.0
  %120 = vmatmul.mubr.f32.gmra.mrb[0].mxu0 %v30
  %v121 = vpop.f32.mrb[0].mxu0
  %v122 = vadd.f32 0.0, %v121
  %v123 = vpop.f32.mrb[0].mxu0
  %124 = vmatprep.mubr.f32.mxu0 0.0
  %125 = vmatmul.mubr.f32.gmra.mrb[0].mxu0 %v33
  %v126 = vpop.f32.mrb[0].mxu0
  %v127 = vadd.f32 0.0, %v126
  %v128 = vpop.f32.mrb[0].mxu0
  %129 = vmatprep.mubr.f32.mxu0 0.0
  %130 = vmatmul.mubr.f32.gmra.mrb[0].mxu0 %v36
  %v131 = vpop.f32.mrb[0].mxu0
  %v132 = vadd.f32 0.0, %v131
  %v133 = vpop.f32.mrb[0].mxu0
  %134 = vmatprep.mubr.f32.mxu0 0.0
  %135 = vmatmul.mubr.f32.gmra.mrb[0].mxu0 %v39
  %v136 = vpop.f32.mrb[0].mxu0
  %v137 = vadd.f32 0.0, %v136
  %v138 = vpop.f32.mrb[0].mxu0
  %139 = vmatprep.mubr.f32.mxu0 0.0
  %140 = vmatmul.mubr.f32.gmra.mrb[0].mxu0 %v42
  %v141 = vpop.f32.mrb[0].mxu0
  %v142 = vadd.f32 0.0, %v141
  %v143 = vpop.f32.mrb[0].mxu0
  %144 = vmatprep.mubr.f32.mxu0 0.0
  %145 = vmatmul.mubr.f32.gmra.mrb[0].mxu0 %v45
  %v146 = vpop.f32.mrb[0].mxu0
  %v147 = vadd.f32 0.0, %v146
  %v148 = vpop.f32.mrb[0].mxu0
  %149 = vmatprep.mubr.f32.mxu0 0.0
  %150 = vmatmul.mubr.f32.gmra.mrb[0].mxu0 %v48
  %v151 = vpop.f32.mrb[0].mxu0
  %v152 = vadd.f32 0.0, %v151
  %v153 = vpop.f32.mrb[0].mxu0
  %154 = vdwg.mxu0
  %v155 = vld [vmem:[%s1] sm:$0x3]
  %v156 = vld [vmem:[%s1 + $0x2] sm:$0x3]
  %v157 = vld [vmem:[%s1 + $0x4] sm:$0x3]
  %v158 = vld [vmem:[%s1 + $0x6] sm:$0x3]
  %v159 = vld [vmem:[%s1 + $0x8] sm:$0x3]
  %v160 = vld [vmem:[%s1 + $0xa] sm:$0x3]
  %v161 = vld [vmem:[%s1 + $0xc] sm:$0x3]
  %v162 = vld [vmem:[%s1 + $0xe] sm:$0x3]
  %v163 = vunpack.c.0.s8 %v155
  %v164 = vunpack.c.0.s8 %v156
  %v165 = vunpack.c.0.s8 %v157
  %v166 = vunpack.c.0.s8 %v158
  %v167 = vunpack.c.0.s8 %v159
  %v168 = vunpack.c.0.s8 %v160
  %v169 = vunpack.c.0.s8 %v161
  %v170 = vunpack.c.0.s8 %v162
  %v171 = vcvt.s32.f32 %v163
  %v172 = vcvt.s32.f32 %v164
  %v173 = vcvt.s32.f32 %v165
  %v174 = vcvt.s32.f32 %v166
  %v175 = vcvt.s32.f32 %v167
  %v176 = vcvt.s32.f32 %v168
  %v177 = vcvt.s32.f32 %v169
  %v178 = vcvt.s32.f32 %v170
  %v179 = vld [vmem:[%s2] sm:$0xff]
  %vm180 = vcmask 64512
  %v182 = vsel %vm180, %v171, 0
  %v185 = vsel %vm180, %v172, 0
  %v188 = vsel %vm180, %v173, 0
  %v191 = vsel %vm180, %v174, 0
  %v194 = vsel %vm180, %v175, 0
  %v197 = vsel %vm180, %v176, 0
  %v200 = vsel %vm180, %v177, 0
  %v203 = vsel %vm180, %v178, 0
  %205 = vmatprep.subr.mxu0 0.0
  %206 = vmatpush1.msra.mxu0 %v179
  %207 = vmatprep.subr.mxu0 0.0
  %208 = vmatpush1.msra.mxu0 0.0
  %209 = vmatprep.subr.mxu0 0.0
  %210 = vmatpush1.msra.mxu0 0.0
  %211 = vmatprep.subr.mxu0 0.0
  %212 = vmatpush1.msra.mxu0 0.0
  %213 = vmatprep.subr.mxu0 0.0
  %214 = vmatpush1.msra.mxu0 0.0
  %215 = vmatprep.subr.mxu0 0.0
  %216 = vmatpush1.msra.mxu0 0.0
  %217 = vmatprep.subr.mxu0 0.0
  %218 = vmatpush1.msra.mxu0 0.0
  %219 = vmatprep.subr.mxu0 0.0
  %220 = vmatpush1.msra.mxu0 0.0
  %221 = vmatprep.subr.mxu0 0.0
  %222 = vmatpush1.msra.mxu0 0.0
  %223 = vmatprep.subr.mxu0 0.0
  %224 = vmatpush1.msra.mxu0 0.0
  %225 = vmatprep.subr.mxu0 0.0
  %226 = vmatpush1.msra.mxu0 0.0
  %227 = vmatprep.subr.mxu0 0.0
  %228 = vmatpush1.msra.mxu0 0.0
  %229 = vmatprep.subr.mxu0 0.0
  %230 = vmatpush1.msra.mxu0 0.0
  %231 = vmatprep.subr.mxu0 0.0
  %232 = vmatpush1.msra.mxu0 0.0
  %233 = vmatprep.subr.mxu0 0.0
  %234 = vmatpush1.msra.mxu0 0.0
  %235 = vmatprep.subr.mxu0 0.0
  %236 = vmatpush1.msra.mxu0 0.0
  %237 = vmatprep.subr.mxu0 0.0
  %238 = vmatpush1.msra.mxu0 0.0
  %239 = vmatprep.subr.mxu0 0.0
  %240 = vmatpush1.msra.mxu0 0.0
  %241 = vmatprep.subr.mxu0 0.0
  %242 = vmatpush1.msra.mxu0 0.0
  %243 = vmatprep.subr.mxu0 0.0
  %244 = vmatpush1.msra.mxu0 0.0
  %245 = vmatprep.subr.mxu0 0.0
  %246 = vmatpush1.msra.mxu0 0.0
  %247 = vmatprep.subr.mxu0 0.0
  %248 = vmatpush1.msra.mxu0 0.0
  %249 = vmatprep.subr.mxu0 0.0
  %250 = vmatpush1.msra.mxu0 0.0
  %251 = vmatprep.subr.mxu0 0.0
  %252 = vmatpush1.msra.mxu0 0.0
  %253 = vmatprep.subr.mxu0 0.0
  %254 = vmatpush1.msra.mxu0 0.0
  %255 = vmatprep.subr.mxu0 0.0
  %256 = vmatpush1.msra.mxu0 0.0
  %257 = vmatprep.subr.mxu0 0.0
  %258 = vmatpush1.msra.mxu0 0.0
  %259 = vmatprep.subr.mxu0 0.0
  %260 = vmatpush1.msra.mxu0 0.0
  %261 = vmatprep.subr.mxu0 0.0
  %262 = vmatpush1.msra.mxu0 0.0
  %263 = vmatprep.subr.mxu0 0.0
  %264 = vmatpush1.msra.mxu0 0.0
  %265 = vmatprep.subr.mxu0 0.0
  %266 = vmatpush1.msra.mxu0 0.0
  %267 = vmatprep.subr.mxu0 0.0
  %268 = vmatpush1.msra.mxu0 0.0
  %269 = vmatprep.mubr.f32.mxu0 0.0
  %270 = vmatmul.mubr.f32.gmra.mrb[0].mxu0 %v182
  %v271 = vpop.f32.mrb[0].mxu0
  %v272 = vadd.f32 0.0, %v271
  %v273 = vpop.f32.mrb[0].mxu0
  %274 = vmatprep.mubr.f32.mxu0 0.0
  %275 = vmatmul.mubr.f32.gmra.mrb[0].mxu0 %v185
  %v276 = vpop.f32.mrb[0].mxu0
  %v277 = vadd.f32 0.0, %v276
  %v278 = vpop.f32.mrb[0].mxu0
  %279 = vmatprep.mubr.f32.mxu0 0.0
  %280 = vmatmul.mubr.f32.gmra.mrb[0].mxu0 %v188
  %v281 = vpop.f32.mrb[0].mxu0
  %v282 = vadd.f32 0.0, %v281
  %v283 = vpop.f32.mrb[0].mxu0
  %284 = vmatprep.mubr.f32.mxu0 0.0
  %285 = vmatmul.mubr.f32.gmra.mrb[0].mxu0 %v191
  %v286 = vpop.f32.mrb[0].mxu0
  %v287 = vadd.f32 0.0, %v286
  %v288 = vpop.f32.mrb[0].mxu0
  %289 = vmatprep.mubr.f32.mxu0 0.0
  %290 = vmatmul.mubr.f32.gmra.mrb[0].mxu0 %v194
  %v291 = vpop.f32.mrb[0].mxu0
  %v292 = vadd.f32 0.0, %v291
  %v293 = vpop.f32.mrb[0].mxu0
  %294 = vmatprep.mubr.f32.mxu0 0.0
  %295 = vmatmul.mubr.f32.gmra.mrb[0].mxu0 %v197
  %v296 = vpop.f32.mrb[0].mxu0
  %v297 = vadd.f32 0.0, %v296
  %v298 = vpop.f32.mrb[0].mxu0
  %299 = vmatprep.mubr.f32.mxu0 0.0
  %300 = vmatmul.mubr.f32.gmra.mrb[0].mxu0 %v200
  %v301 = vpop.f32.mrb[0].mxu0
  %v302 = vadd.f32 0.0, %v301
  %v303 = vpop.f32.mrb[0].mxu0
  %304 = vmatprep.mubr.f32.mxu0 0.0
  %305 = vmatmul.mubr.f32.gmra.mrb[0].mxu0 %v203
  %v306 = vpop.f32.mrb[0].mxu0
  %v307 = vadd.f32 0.0, %v306
  %v308 = vpop.f32.mrb[0].mxu0
  %309 = vdwg.mxu0
  %vm310 = vcmp.ne.f32.partialorder %v272, 0.0
  %vm311 = vcmp.ne.f32.partialorder %v277, 0.0
  %vm312 = vcmp.ne.f32.partialorder %v282, 0.0
  %vm313 = vcmp.ne.f32.partialorder %v287, 0.0
  %vm314 = vcmp.ne.f32.partialorder %v292, 0.0
  %vm315 = vcmp.ne.f32.partialorder %v297, 0.0
  %vm316 = vcmp.ne.f32.partialorder %v302, 0.0
  %vm317 = vcmp.ne.f32.partialorder %v307, 0.0
  %v318 = vsel %vm310, %v117, -9999999.0
  %v319 = vsel %vm311, %v122, -9999999.0
  %v320 = vsel %vm312, %v127, -9999999.0
  %v321 = vsel %vm313, %v132, -9999999.0
  %v322 = vsel %vm314, %v137, -9999999.0
  %v323 = vsel %vm315, %v142, -9999999.0
  %v324 = vsel %vm316, %v147, -9999999.0
  %v325 = vsel %vm317, %v152, -9999999.0
  %v326 = vld [vmem:[%s3] sm:$0xff]
  %v327 = vld [vmem:[%s3 + $0x8] sm:$0xff]
  %v328 = vld [vmem:[%s3 + $0x10] sm:$0xff]
  %v329 = vld [vmem:[%s3 + $0x18] sm:$0xff]
  %v330 = vld [vmem:[%s3 + $0x20] sm:$0xff]
  %v331 = vld [vmem:[%s3 + $0x28] sm:$0xff]
  %v332 = vld [vmem:[%s3 + $0x30] sm:$0xff]
  %v333 = vld [vmem:[%s3 + $0x38] sm:$0xff]
  %v334 = vadd.f32 %v318, %v326
  %v335 = vadd.f32 %v319, %v327
  %v336 = vadd.f32 %v320, %v328
  %v337 = vadd.f32 %v321, %v329
  %v338 = vadd.f32 %v322, %v330
  %v339 = vadd.f32 %v323, %v331
  %v340 = vadd.f32 %v324, %v332
  %v341 = vadd.f32 %v325, %v333
  %vm342 = vcmask 523264
  %v343 = vsel %vm342, %v334, -inf
  %344 = vmax.xlane.f32.xlu0 %v343
  %v345 = vpop.xlane.xlu0 %344
  %v346 = vsel %vm342, %v335, -inf
  %347 = vmax.xlane.f32.xlu0 %v346
  %v348 = vpop.xlane.xlu0 %347
  %v349 = vsel %vm342, %v336, -inf
  %350 = vmax.xlane.f32.xlu0 %v349
  %v351 = vpop.xlane.xlu0 %350
  %v352 = vsel %vm342, %v337, -inf
  %353 = vmax.xlane.f32.xlu0 %v352
  %v354 = vpop.xlane.xlu0 %353
  %v355 = vsel %vm342, %v338, -inf
  %356 = vmax.xlane.f32.xlu0 %v355
  %v357 = vpop.xlane.xlu0 %356
  %v358 = vsel %vm342, %v339, -inf
  %359 = vmax.xlane.f32.xlu0 %v358
  %v360 = vpop.xlane.xlu0 %359
  %v361 = vsel %vm342, %v340, -inf
  %362 = vmax.xlane.f32.xlu0 %v361
  %v363 = vpop.xlane.xlu0 %362
  %v364 = vsel %vm342, %v341, -inf
  %365 = vmax.xlane.f32.xlu0 %v364
  %v366 = vpop.xlane.xlu0 %365
  %v367 = vsub.f32 %v334, %v345
  %v368 = vsub.f32 %v335, %v348
  %v369 = vsub.f32 %v336, %v351
  %v370 = vsub.f32 %v337, %v354
  %v371 = vsub.f32 %v338, %v357
  %v372 = vsub.f32 %v339, %v360
  %v373 = vsub.f32 %v340, %v363
  %v374 = vsub.f32 %v341, %v366
  %v375 = vmul.f32 %v367, 1.442695
  %v376 = vpow.pop %v375
  %v377 = vmul.f32 %v368, 1.442695
  %v378 = vpow.pop %v377
  %v379 = vmul.f32 %v369, 1.442695
  %v380 = vpow.pop %v379
  %v381 = vmul.f32 %v370, 1.442695
  %v382 = vpow.pop %v381
  %v383 = vmul.f32 %v371, 1.442695
  %v384 = vpow.pop %v383
  %v385 = vmul.f32 %v372, 1.442695
  %v386 = vpow.pop %v385
  %v387 = vmul.f32 %v373, 1.442695
  %v388 = vpow.pop %v387
  %v389 = vmul.f32 %v374, 1.442695
  %v390 = vpow.pop %v389
  %v391 = vsel %vm342, %v376, 0.0
  %392 = vadd.xlane.f32.xlu0 %v391
  %v393 = vpop.xlane.xlu0 %392
  %v394 = vsel %vm342, %v378, 0.0
  %395 = vadd.xlane.f32.xlu0 %v394
  %v396 = vpop.xlane.xlu0 %395
  %v397 = vsel %vm342, %v380, 0.0
  %398 = vadd.xlane.f32.xlu0 %v397
  %v399 = vpop.xlane.xlu0 %398
  %v400 = vsel %vm342, %v382, 0.0
  %401 = vadd.xlane.f32.xlu0 %v400
  %v402 = vpop.xlane.xlu0 %401
  %v403 = vsel %vm342, %v384, 0.0
  %404 = vadd.xlane.f32.xlu0 %v403
  %v405 = vpop.xlane.xlu0 %404
  %v406 = vsel %vm342, %v386, 0.0
  %407 = vadd.xlane.f32.xlu0 %v406
  %v408 = vpop.xlane.xlu0 %407
  %v409 = vsel %vm342, %v388, 0.0
  %410 = vadd.xlane.f32.xlu0 %v409
  %v411 = vpop.xlane.xlu0 %410
  %v412 = vsel %vm342, %v390, 0.0
  %413 = vadd.xlane.f32.xlu0 %v412
  %v414 = vpop.xlane.xlu0 %413
  %v416 = vsel %vm342, %v376, 0
  %v419 = vsel %vm342, %v378, 0
  %v422 = vsel %vm342, %v380, 0
  %v425 = vsel %vm342, %v382, 0
  %v428 = vsel %vm342, %v384, 0
  %v431 = vsel %vm342, %v386, 0
  %v434 = vsel %vm342, %v388, 0
  %v437 = vsel %vm342, %v390, 0
  %439 = vmatprep.subr.mxu0 0.0
  %440 = vmatpush1.msra.mxu0 %v17
  %441 = vmatprep.subr.mxu0 0.0
  %442 = vmatpush1.msra.mxu0 %v18
  %443 = vmatprep.subr.mxu0 0.0
  %444 = vmatpush1.msra.mxu0 %v19
  %445 = vmatprep.subr.mxu0 0.0
  %446 = vmatpush1.msra.mxu0 %v20
  %447 = vmatprep.subr.mxu0 0.0
  %448 = vmatpush1.msra.mxu0 %v21
  %449 = vmatprep.subr.mxu0 0.0
  %450 = vmatpush1.msra.mxu0 %v22
  %451 = vmatprep.subr.mxu0 0.0
  %452 = vmatpush1.msra.mxu0 %v23
  %453 = vmatprep.subr.mxu0 0.0
  %454 = vmatpush1.msra.mxu0 %v24
  %455 = vmatprep.subr.mxu0 0.0
  %456 = vmatpush1.msra.mxu0 0.0
  %457 = vmatprep.subr.mxu0 0.0
  %458 = vmatpush1.msra.mxu0 0.0
  %459 = vmatprep.subr.mxu0 0.0
  %460 = vmatpush1.msra.mxu0 0.0
  %461 = vmatprep.subr.mxu0 0.0
  %462 = vmatpush1.msra.mxu0 0.0
  %463 = vmatprep.subr.mxu0 0.0
  %464 = vmatpush1.msra.mxu0 0.0
  %465 = vmatprep.subr.mxu0 0.0
  %466 = vmatpush1.msra.mxu0 0.0
  %467 = vmatprep.subr.mxu0 0.0
  %468 = vmatpush1.msra.mxu0 0.0
  %469 = vmatprep.subr.mxu0 0.0
  %470 = vmatpush1.msra.mxu0 0.0
  %471 = vmatprep.subr.mxu0 0.0
  %472 = vmatpush1.msra.mxu0 0.0
  %473 = vmatprep.subr.mxu0 0.0
  %474 = vmatpush1.msra.mxu0 0.0
  %475 = vmatprep.subr.mxu0 0.0
  %476 = vmatpush1.msra.mxu0 0.0
  %477 = vmatprep.subr.mxu0 0.0
  %478 = vmatpush1.msra.mxu0 0.0
  %479 = vmatprep.subr.mxu0 0.0
  %480 = vmatpush1.msra.mxu0 0.0
  %481 = vmatprep.subr.mxu0 0.0
  %482 = vmatpush1.msra.mxu0 0.0
  %483 = vmatprep.subr.mxu0 0.0
  %484 = vmatpush1.msra.mxu0 0.0
  %485 = vmatprep.subr.mxu0 0.0
  %486 = vmatpush1.msra.mxu0 0.0
  %487 = vmatprep.subr.mxu0 0.0
  %488 = vmatpush1.msra.mxu0 0.0
  %489 = vmatprep.subr.mxu0 0.0
  %490 = vmatpush1.msra.mxu0 0.0
  %491 = vmatprep.subr.mxu0 0.0
  %492 = vmatpush1.msra.mxu0 0.0
  %493 = vmatprep.subr.mxu0 0.0
  %494 = vmatpush1.msra.mxu0 0.0
  %495 = vmatprep.subr.mxu0 0.0
  %496 = vmatpush1.msra.mxu0 0.0
  %497 = vmatprep.subr.mxu0 0.0
  %498 = vmatpush1.msra.mxu0 0.0
  %499 = vmatprep.subr.mxu0 0.0
  %500 = vmatpush1.msra.mxu0 0.0
  %501 = vmatprep.subr.mxu0 0.0
  %502 = vmatpush1.msra.mxu0 0.0
  %503 = vmatprep.mubr.f32.mxu0 0.0
  %504 = vmatmul.mubr.f32.gmra.mrb[0].mxu0 %v416
  %v505 = vpop.f32.mrb[0].mxu0
  %v506 = vadd.f32 0.0, %v505
  %v507 = vpop.f32.mrb[0].mxu0
  %508 = vmatprep.mubr.f32.mxu0 0.0
  %509 = vmatmul.mubr.f32.gmra.mrb[0].mxu0 %v419
  %v510 = vpop.f32.mrb[0].mxu0
  %v511 = vadd.f32 0.0, %v510
  %v512 = vpop.f32.mrb[0].mxu0
  %513 = vmatprep.mubr.f32.mxu0 0.0
  %514 = vmatmul.mubr.f32.gmra.mrb[0].mxu0 %v422
  %v515 = vpop.f32.mrb[0].mxu0
  %v516 = vadd.f32 0.0, %v515
  %v517 = vpop.f32.mrb[0].mxu0
  %518 = vmatprep.mubr.f32.mxu0 0.0
  %519 = vmatmul.mubr.f32.gmra.mrb[0].mxu0 %v425
  %v520 = vpop.f32.mrb[0].mxu0
  %v521 = vadd.f32 0.0, %v520
  %v522 = vpop.f32.mrb[0].mxu0
  %523 = vmatprep.mubr.f32.mxu0 0.0
  %524 = vmatmul.mubr.f32.gmra.mrb[0].mxu0 %v428
  %v525 = vpop.f32.mrb[0].mxu0
  %v526 = vadd.f32 0.0, %v525
  %v527 = vpop.f32.mrb[0].mxu0
  %528 = vmatprep.mubr.f32.mxu0 0.0
  %529 = vmatmul.mubr.f32.gmra.mrb[0].mxu0 %v431
  %v530 = vpop.f32.mrb[0].mxu0
  %v531 = vadd.f32 0.0, %v530
  %v532 = vpop.f32.mrb[0].mxu0
  %533 = vmatprep.mubr.f32.mxu0 0.0
  %534 = vmatmul.mubr.f32.gmra.mrb[0].mxu0 %v434
  %v535 = vpop.f32.mrb[0].mxu0
  %v536 = vadd.f32 0.0, %v535
  %v537 = vpop.f32.mrb[0].mxu0
  %538 = vmatprep.mubr.f32.mxu0 0.0
  %539 = vmatmul.mubr.f32.gmra.mrb[0].mxu0 %v437
  %v540 = vpop.f32.mrb[0].mxu0
  %v541 = vadd.f32 0.0, %v540
  %v542 = vpop.f32.mrb[0].mxu0
  %543 = vdwg.mxu0
  %v544 = vrcp.pop %v393
  %v545 = vrcp.pop %v396
  %v546 = vrcp.pop %v399
  %v547 = vrcp.pop %v402
  %v548 = vrcp.pop %v405
  %v549 = vrcp.pop %v408
  %v550 = vrcp.pop %v411
  %v551 = vrcp.pop %v414
  %v552 = vmul.f32 %v506, %v544
  %v553 = vmul.f32 %v511, %v545
  %v554 = vmul.f32 %v516, %v546
  %v555 = vmul.f32 %v521, %v547
  %v556 = vmul.f32 %v526, %v548
  %v557 = vmul.f32 %v531, %v549
  %v558 = vmul.f32 %v536, %v550
  %v559 = vmul.f32 %v541, %v551
  %560 = vst.msk [vmem:[%s4] sm:$0xff] %vm25, %v552
  %561 = vst.msk [vmem:[%s4 + $0x8] sm:$0xff] %vm25, %v553
  %562 = vst.msk [vmem:[%s4 + $0x10] sm:$0xff] %vm25, %v554
  %563 = vst.msk [vmem:[%s4 + $0x18] sm:$0xff] %vm25, %v555
  %564 = vst.msk [vmem:[%s4 + $0x20] sm:$0xff] %vm25, %v556
  %565 = vst.msk [vmem:[%s4 + $0x28] sm:$0xff] %vm25, %v557
  %566 = vst.msk [vmem:[%s4 + $0x30] sm:$0xff] %vm25, %v558
  %567 = vst.msk [vmem:[%s4 + $0x38] sm:$0xff] %vm25, %v559
  // Predicated region
  $region18: #{tpu_custom_call.1} parent=0 // pred_check
    _
  $region19: #{tpu_custom_call.1} parent=0 // pred_check_branch
    %569 = sbr.rel (0) target = $region21
  $region20: #{tpu_custom_call.1} parent=0 // pred_region
    _
  $region21: #{tpu_custom_call.1} parent=0 // pred_fallthru
    _
  // Predicated region
  $region22: #{tpu_custom_call.1} parent=0 // pred_check
    _
  $region23: #{tpu_custom_call.1} parent=0 // pred_check_branch
    %571 = sbr.rel (0) target = $region25
  $region24: #{tpu_custom_call.1} parent=0 // pred_region
    _
  $region25: #{tpu_custom_call.1} parent=0 // pred_fallthru
    _

</llo_original>
